<compile_context>
chip_gen: v7x
topology: tpu7x:2x2x1
jax: 0.10.0
libtpu: 0.0.40
codegen_flags: <defaults>
</compile_context>

<pallas_src>
import functools

import jax
import jax.numpy as jnp
from jax.experimental import pallas as pl
from jax.experimental.pallas import tpu as pltpu


def _round_up(x, m):
    return ((x + m - 1) // m) * m


def _cdiv(a, b):
    return (a + b - 1) // b


_COMPILER_PARAMS = pltpu.CompilerParams(
    dimension_semantics=("parallel",),      # row tiles are independent
)


# ----------------------------------------------------------------------------
# Pallas kernels
# ----------------------------------------------------------------------------
def _mm_bias_act_kernel(x_ref, w_ref, b_ref, o_ref, *, relu):
    """One (TM, K) x (K, N) tile: bf16 matmul, f32 accumulate, bias, ReLU."""
    acc = jnp.dot(x_ref[...], w_ref[...], preferred_element_type=jnp.float32)
    acc = acc + b_ref[...]                  # (1, N) broadcasts over rows, f32
    if relu:
        acc = jnp.maximum(acc, 0.0)
    o_ref[...] = acc.astype(o_ref.dtype)


def _mm_relu_mm_kernel(x_ref, w1_ref, b1_ref, w2_ref, b2_ref, o_ref):
    """Fused stage2 3x3-conv (as matmul) + ReLU + 1x1 seg head on one tile."""
    h = jnp.dot(x_ref[...], w1_ref[...], preferred_element_type=jnp.float32)
    h = jnp.maximum(h + b1_ref[...], 0.0)
    y = jnp.dot(h.astype(jnp.bfloat16), w2_ref[...],
                preferred_element_type=jnp.float32)
    o_ref[...] = (y + b2_ref[...]).astype(o_ref.dtype)


# ----------------------------------------------------------------------------
# Wrappers around pallas_call
# ----------------------------------------------------------------------------
def _pick_tm(M, tm):
    # Ensure >= 2 row tiles whenever possible (v7x dual-TC sharding), rows
    # always a multiple of 8 (sublane tiling rule).
    return min(tm, max(8, _round_up(_cdiv(M, 2), 8)))


def matmul_bias_act(x, w, b, *, relu=False, out_dtype=jnp.float32, tm=2048):
    """(M, K) @ (K, N) + b with optional ReLU.  Full K/N extents, tiled M."""
    M, K = x.shape
    K2, N = w.shape
    assert K == K2, (K, K2)
    TM = _pick_tm(M, tm)
    Mp = _round_up(M, TM)

    xp = x.astype(jnp.bfloat16)
    if Mp != M:
        xp = jnp.pad(xp, ((0, Mp - M), (0, 0)))
    wp = w.astype(jnp.bfloat16)
    bp = b.astype(jnp.float32).reshape(1, N)

    out_isz = jnp.dtype(out_dtype).itemsize
    cost = pl.CostEstimate(
        flops=2 * M * K * N,
        transcendentals=0,
        bytes_accessed=M * K * 2 + K * N * 2 + N * 4 + M * N * out_isz,
    )
    out = pl.pallas_call(
        functools.partial(_mm_bias_act_kernel, relu=relu),
        out_shape=jax.ShapeDtypeStruct((Mp, N), out_dtype),
        grid=(Mp // TM,),
        in_specs=[
            pl.BlockSpec((TM, K), lambda i: (i, 0)),
            pl.BlockSpec((K, N), lambda i: (0, 0)),
            pl.BlockSpec((1, N), lambda i: (0, 0)),
        ],
        out_specs=pl.BlockSpec((TM, N), lambda i: (i, 0)),
        compiler_params=_COMPILER_PARAMS,
        cost_estimate=cost,
    )(xp, wp, bp)
    return out if Mp == M else out[:M]


def matmul_relu_matmul(x, w1, b1, w2, b2, *, out_dtype=jnp.float32, tm=2048):
    """Fused: relu(x @ w1 + b1) @ w2 + b2.  Full K/N extents, tiled M."""
    M, K = x.shape
    K1, N1 = w1.shape
    N1b, N2 = w2.shape
    assert K == K1 and N1 == N1b, (K, K1, N1, N1b)
    TM = _pick_tm(M, tm)
    Mp = _round_up(M, TM)

    xp = x.astype(jnp.bfloat16)
    if Mp != M:
        xp = jnp.pad(xp, ((0, Mp - M), (0, 0)))
    w1p = w1.astype(jnp.bfloat16)
    b1p = b1.astype(jnp.float32).reshape(1, N1)
    w2p = w2.astype(jnp.bfloat16)
    b2p = b2.astype(jnp.float32).reshape(1, N2)

    out_isz = jnp.dtype(out_dtype).itemsize
    cost = pl.CostEstimate(
        flops=2 * M * K * N1 + 2 * M * N1 * N2,
        transcendentals=0,
        bytes_accessed=(M * K * 2 + K * N1 * 2 + N1 * N2 * 2
                        + (N1 + N2) * 4 + M * N2 * out_isz),
    )
    out = pl.pallas_call(
        _mm_relu_mm_kernel,
        out_shape=jax.ShapeDtypeStruct((Mp, N2), out_dtype),
        grid=(Mp // TM,),
        in_specs=[
            pl.BlockSpec((TM, K), lambda i: (i, 0)),
            pl.BlockSpec((K, N1), lambda i: (0, 0)),
            pl.BlockSpec((1, N1), lambda i: (0, 0)),
            pl.BlockSpec((N1, N2), lambda i: (0, 0)),
            pl.BlockSpec((1, N2), lambda i: (0, 0)),
        ],
        out_specs=pl.BlockSpec((TM, N2), lambda i: (i, 0)),
        compiler_params=_COMPILER_PARAMS,
        cost_estimate=cost,
    )(xp, w1p, b1p, w2p, b2p)
    return out if Mp == M else out[:M]


# ----------------------------------------------------------------------------
# Glue: im2col (plain JAX, bf16) + conv wrappers
# ----------------------------------------------------------------------------
def _im2col(x_nhwc, kh, kw, stride, pad):
    N, H, W, C = x_nhwc.shape
    xp = jnp.pad(x_nhwc, ((0, 0), (pad, pad), (pad, pad), (0, 0)))
    Ho = (H + 2 * pad - kh) // stride + 1
    Wo = (W + 2 * pad - kw) // stride + 1
    taps = [xp[:, i:i + stride * Ho:stride, j:j + stride * Wo:stride, :]
            for i in range(kh) for j in range(kw)]
    patches = jnp.stack(taps, axis=3)                 # (N, Ho, Wo, kh*kw, C)
    return patches.reshape(N * Ho * Wo, kh * kw * C), (N, Ho, Wo)


def _wmat(w_oihw):
    # (Cout, Cin, kh, kw) -> (kh*kw*Cin, Cout); matches patches' (tap, C) order.
    Cout, Cin, kh, kw = w_oihw.shape
    return jnp.transpose(w_oihw, (2, 3, 1, 0)).reshape(kh * kw * Cin, Cout)


def conv_stem_nhwc_bf16(x_nchw, w_oihw, b):
    """3x3 stride-2 pad-1 conv + ReLU.  Returns NHWC bf16 feature map."""
    # Cast to bf16 *before* im2col so the 9x patch tensor is built in bf16.
    x = jnp.transpose(x_nchw, (0, 2, 3, 1)).astype(jnp.bfloat16)
    Cout, Cin, kh, kw = w_oihw.shape
    patches, (N, Ho, Wo) = _im2col(x, kh, kw, stride=2, pad=1)
    out = matmul_bias_act(patches, _wmat(w_oihw), b, relu=True,
                          out_dtype=jnp.bfloat16)
    return out.reshape(N, Ho, Wo, Cout)


def conv3x3_relu_then_1x1(x_nhwc, w1_oihw, b1, w2_oihw, b2):
    """Fused: 3x3 stride-2 conv + ReLU, then 1x1 conv head.  NHWC in, NCHW out."""
    C2, C1, kh, kw = w1_oihw.shape
    NC, C2b, kh2, kw2 = w2_oihw.shape
    assert (kh2, kw2) == (1, 1) and C2b == C2
    patches, (N, Ho, Wo) = _im2col(x_nhwc, kh, kw, stride=2, pad=1)
    out = matmul_relu_matmul(patches, _wmat(w1_oihw), b1, _wmat(w2_oihw), b2,
                             out_dtype=jnp.float32)
    return jnp.transpose(out.reshape(N, Ho, Wo, NC), (0, 3, 1, 2))


# ----------------------------------------------------------------------------
# Synthetic DDNTemplateVMam forward
# ----------------------------------------------------------------------------
def _forward_impl(params, images):
    p = params
    # result['features'] = self.model.backbone(x)[0]   (stage1, kept NHWC bf16)
    feat1_nhwc = conv_stem_nhwc_bf16(images, p["stem_w"], p["stem_b"])
    # result['logits'] = self.model(x)   (stage2 + 1x1 seg head, fused kernel)
    logits = conv3x3_relu_then_1x1(feat1_nhwc, p["stage2_w"], p["stage2_b"],
                                   p["seg_w"], p["seg_b"])
    # User-facing features: upcast once to f32 NCHW to match module contract.
    features = jnp.transpose(feat1_nhwc, (0, 3, 1, 2)).astype(jnp.float32)
    return {"features": features, "logits": logits}


_forward = jax.jit(_forward_impl)


class DDNTemplateVMamPallas:
    """Synthetic stand-in for DDNTemplateVMam with deterministic parameters.

    Backbone:
      stage1 : 3x3 conv stride 2 (Cin=3 -> C1), ReLU   -> features[0]
      stage2 : 3x3 conv stride 2 (C1   -> C2), ReLU
    Seg model head:
      conv_seg : 1x1 conv (C2 -> num_classes)          -> logits
    """

    def __init__(self, num_classes=16, c1=32, c2=64, seed=0):
        self.num_classes = num_classes
        key = jax.random.PRNGKey(seed)
        k = jax.random.split(key, 3)

        def kaiming(key, shape):
            fan_in = shape[1] * shape[2] * shape[3]
            return (jax.random.normal(key, shape, jnp.float32)
                    * jnp.sqrt(2.0 / fan_in))

        self.params = {
            "stem_w": kaiming(k[0], (c1, 3, 3, 3)),
            "stem_b": jnp.zeros((c1,), jnp.float32),
            "stage2_w": kaiming(k[1], (c2, c1, 3, 3)),
            "stage2_b": jnp.zeros((c2,), jnp.float32),
            "seg_w": kaiming(k[2], (num_classes, c2, 1, 1)),
            "seg_b": jnp.zeros((num_classes,), jnp.float32),
        }
        # TODO(synk): DepthHead(in_channels=128, out_channels=151) is constructed
        # in the reference __init__ but never invoked in forward(); omitted here.

    def __call__(self, images):
        return _forward(self.params, images)


# ----------------------------------------------------------------------------
# Pure-JAX f32 reference (tolerance check vs bf16-carried Pallas pipeline)
# ----------------------------------------------------------------------------
def _conv_ref(x, w, b, stride, pad, relu):
    y = jax.lax.conv_general_dilated(
        x, w, window_strides=(stride, stride),
        padding=[(pad, pad), (pad, pad)],
        dimension_numbers=("NCHW", "OIHW", "NCHW"))
    y = y + b.reshape(1, -1, 1, 1)
    return jnp.maximum(y, 0.0) if relu else y


def _forward_ref(params, images):
    p = params
    feat1 = _conv_ref(images, p["stem_w"], p["stem_b"], 2, 1, True)
    feat2 = _conv_ref(feat1, p["stage2_w"], p["stage2_b"], 2, 1, True)
    logits = _conv_ref(feat2, p["seg_w"], p["seg_b"], 1, 0, False)
    return {"features": feat1, "logits": logits}


# ----------------------------------------------------------------------------
if __name__ == "__main__":
    key = jax.random.PRNGKey(0)
    N, C, H, W = 2, 3, 16, 16
    images = jax.random.normal(key, (N, C, H, W), dtype=jnp.float32)

    model = DDNTemplateVMamPallas(num_classes=16, c1=32, c2=64, seed=0)
    out = model(images)
    jax.block_until_ready(out["features"])
    jax.block_until_ready(out["logits"])

    assert out["features"].shape == (N, 32, H // 2, W // 2), out["features"].shape
    assert out["logits"].shape == (N, 16, H // 4, W // 4), out["logits"].shape

    ref = _forward_ref(model.params, images)
    for name in ("features", "logits"):
        diff = float(jnp.max(jnp.abs(out[name].astype(jnp.float32) - ref[name])))
        scale = float(jnp.max(jnp.abs(ref[name]))) + 1e-6
        # 5% relative tolerance: operands + inter-stage tensor carried in bf16,
        # accumulation in f32.
        assert diff / scale < 5e-2, (name, diff, scale)

    print("KERNEL_OK")
</pallas_src>

<mosaic_0001>
module attributes {stable_mosaic.version = 11 : i64} {
  func.func @_mm_bias_act_kernel(%arg0: i32, %arg1: memref<64x27xbf16, #tpu.memory_space<vmem>>, %arg2: memref<27x32xbf16, #tpu.memory_space<vmem>>, %arg3: memref<1x32xf32, #tpu.memory_space<vmem>>, %arg4: memref<64x32xbf16, #tpu.memory_space<vmem>>) attributes {dimension_semantics = [#tpu.dimension_semantics<parallel>], iteration_bounds = array<i64: 2>, scalar_prefetch = 0 : i64, scratch_operands = 0 : i64, tpu.core_type = #tpu.core_type<tc>, window_params = [{transform_indices = @transform_0, window_bounds = array<i64: 64, 27>}, {pipeline_mode = #tpu.pipeline_mode<synchronous>, transform_indices = @transform_1, window_bounds = array<i64: 27, 32>}, {pipeline_mode = #tpu.pipeline_mode<synchronous>, transform_indices = @transform_2, window_bounds = array<i64: 1, 32>}, {transform_indices = @transform_3, window_bounds = array<i64: 64, 32>}]} {
    %c0 = arith.constant 0 : index
    %c0_0 = arith.constant 0 : index
    %0 = vector.load %arg1[%c0, %c0_0] : memref<64x27xbf16, #tpu.memory_space<vmem>>, vector<64x27xbf16>
    %c0_1 = arith.constant 0 : index
    %c0_2 = arith.constant 0 : index
    %1 = vector.load %arg2[%c0_1, %c0_2] : memref<27x32xbf16, #tpu.memory_space<vmem>>, vector<27x32xbf16>
    %cst = arith.constant dense<0.000000e+00> : vector<64x32xf32>
    %2 = tpu.matmul %0, %1, %cst {dimension_numbers = #tpu.dot_dimension_numbers<[1], [0], [0], [1], [0, 0, 1, 1], [], []>} : vector<64x27xbf16>, vector<27x32xbf16>, vector<64x32xf32> -> vector<64x32xf32>
    %c0_3 = arith.constant 0 : index
    %c0_4 = arith.constant 0 : index
    %3 = vector.load %arg3[%c0_3, %c0_4] : memref<1x32xf32, #tpu.memory_space<vmem>>, vector<1x32xf32>
    %4 = vector.broadcast %3 : vector<1x32xf32> to vector<64x32xf32>
    %5 = arith.addf %2, %4 : vector<64x32xf32>
    %cst_5 = arith.constant 0.000000e+00 : f32
    %6 = vector.broadcast %cst_5 : f32 to vector<64x32xf32>
    %7 = arith.maximumf %5, %6 : vector<64x32xf32>
    %8 = arith.truncf %7 : vector<64x32xf32> to vector<64x32xbf16>
    %c0_6 = arith.constant 0 : index
    %c0_7 = arith.constant 0 : index
    %9 = vector.load %arg4[%c0_6, %c0_7] : memref<64x32xbf16, #tpu.memory_space<vmem>>, vector<64x32xbf16>
    tpu.vector_store %arg4[%c0_6, %c0_7], %8 {strides = array<i32>} : memref<64x32xbf16, #tpu.memory_space<vmem>>, vector<64x32xbf16>,
    return
  }
  func.func @transform_0(%arg0: i32) -> (i32, i32) {
    %c0_i32 = arith.constant 0 : i32
    %c0_i32_0 = arith.constant 0 : i32
    return %arg0, %c0_i32 : i32, i32
  }
  func.func @transform_1(%arg0: i32) -> (i32, i32) {
    %c0_i32 = arith.constant 0 : i32
    %c0_i32_0 = arith.constant 0 : i32
    %c0_i32_1 = arith.constant 0 : i32
    return %c0_i32, %c0_i32_0 : i32, i32
  }
  func.func @transform_2(%arg0: i32) -> (i32, i32) {
    %c0_i32 = arith.constant 0 : i32
    %c0_i32_0 = arith.constant 0 : i32
    %c0_i32_1 = arith.constant 0 : i32
    return %c0_i32, %c0_i32_0 : i32, i32
  }
  func.func @transform_3(%arg0: i32) -> (i32, i32) {
    %c0_i32 = arith.constant 0 : i32
    %c0_i32_0 = arith.constant 0 : i32
    return %arg0, %c0_i32 : i32, i32
  }
}

module attributes {stable_mosaic.version = 11 : i64} {
  func.func @_mm_relu_mm_kernel(%arg0: i32, %arg1: memref<16x288xbf16, #tpu.memory_space<vmem>>, %arg2: memref<288x64xbf16, #tpu.memory_space<vmem>>, %arg3: memref<1x64xf32, #tpu.memory_space<vmem>>, %arg4: memref<64x16xbf16, #tpu.memory_space<vmem>>, %arg5: memref<1x16xf32, #tpu.memory_space<vmem>>, %arg6: memref<16x16xf32, #tpu.memory_space<vmem>>) attributes {dimension_semantics = [#tpu.dimension_semantics<parallel>], iteration_bounds = array<i64: 2>, scalar_prefetch = 0 : i64, scratch_operands = 0 : i64, tpu.core_type = #tpu.core_type<tc>, window_params = [{transform_indices = @transform_0, window_bounds = array<i64: 16, 288>}, {pipeline_mode = #tpu.pipeline_mode<synchronous>, transform_indices = @transform_1, window_bounds = array<i64: 288, 64>}, {pipeline_mode = #tpu.pipeline_mode<synchronous>, transform_indices = @transform_2, window_bounds = array<i64: 1, 64>}, {pipeline_mode = #tpu.pipeline_mode<synchronous>, transform_indices = @transform_3, window_bounds = array<i64: 64, 16>}, {pipeline_mode = #tpu.pipeline_mode<synchronous>, transform_indices = @transform_4, window_bounds = array<i64: 1, 16>}, {transform_indices = @transform_5, window_bounds = array<i64: 16, 16>}]} {
    %c0 = arith.constant 0 : index
    %c0_0 = arith.constant 0 : index
    %0 = vector.load %arg1[%c0, %c0_0] : memref<16x288xbf16, #tpu.memory_space<vmem>>, vector<16x288xbf16>
    %c0_1 = arith.constant 0 : index
    %c0_2 = arith.constant 0 : index
    %1 = vector.load %arg2[%c0_1, %c0_2] : memref<288x64xbf16, #tpu.memory_space<vmem>>, vector<288x64xbf16>
    %cst = arith.constant dense<0.000000e+00> : vector<16x64xf32>
    %2 = tpu.matmul %0, %1, %cst {dimension_numbers = #tpu.dot_dimension_numbers<[1], [0], [0], [1], [0, 0, 1, 1], [], []>} : vector<16x288xbf16>, vector<288x64xbf16>, vector<16x64xf32> -> vector<16x64xf32>
    %c0_3 = arith.constant 0 : index
    %c0_4 = arith.constant 0 : index
    %3 = vector.load %arg3[%c0_3, %c0_4] : memref<1x64xf32, #tpu.memory_space<vmem>>, vector<1x64xf32>
    %4 = vector.broadcast %3 : vector<1x64xf32> to vector<16x64xf32>
    %5 = arith.addf %2, %4 : vector<16x64xf32>
    %cst_5 = arith.constant 0.000000e+00 : f32
    %6 = vector.broadcast %cst_5 : f32 to vector<16x64xf32>
    %7 = arith.maximumf %5, %6 : vector<16x64xf32>
    %8 = arith.truncf %7 : vector<16x64xf32> to vector<16x64xbf16>
    %c0_6 = arith.constant 0 : index
    %c0_7 = arith.constant 0 : index
    %9 = vector.load %arg4[%c0_6, %c0_7] : memref<64x16xbf16, #tpu.memory_space<vmem>>, vector<64x16xbf16>
    %cst_8 = arith.constant dense<0.000000e+00> : vector<16x16xf32>
    %10 = tpu.matmul %8, %9, %cst_8 {dimension_numbers = #tpu.dot_dimension_numbers<[1], [0], [0], [1], [0, 0, 1, 1], [], []>} : vector<16x64xbf16>, vector<64x16xbf16>, vector<16x16xf32> -> vector<16x16xf32>
    %c0_9 = arith.constant 0 : index
    %c0_10 = arith.constant 0 : index
    %11 = vector.load %arg5[%c0_9, %c0_10] : memref<1x16xf32, #tpu.memory_space<vmem>>, vector<1x16xf32>
    %12 = vector.broadcast %11 : vector<1x16xf32> to vector<16x16xf32>
    %13 = arith.addf %10, %12 : vector<16x16xf32>
    %c0_11 = arith.constant 0 : index
    %c0_12 = arith.constant 0 : index
    %14 = vector.load %arg6[%c0_11, %c0_12] : memref<16x16xf32, #tpu.memory_space<vmem>>, vector<16x16xf32>
    tpu.vector_store %arg6[%c0_11, %c0_12], %13 {strides = array<i32>} : memref<16x16xf32, #tpu.memory_space<vmem>>, vector<16x16xf32>,
    return
  }
  func.func @transform_0(%arg0: i32) -> (i32, i32) {
    %c0_i32 = arith.constant 0 : i32
    %c0_i32_0 = arith.constant 0 : i32
    return %arg0, %c0_i32 : i32, i32
  }
  func.func @transform_1(%arg0: i32) -> (i32, i32) {
    %c0_i32 = arith.constant 0 : i32
    %c0_i32_0 = arith.constant 0 : i32
    %c0_i32_1 = arith.constant 0 : i32
    return %c0_i32, %c0_i32_0 : i32, i32
  }
  func.func @transform_2(%arg0: i32) -> (i32, i32) {
    %c0_i32 = arith.constant 0 : i32
    %c0_i32_0 = arith.constant 0 : i32
    %c0_i32_1 = arith.constant 0 : i32
    return %c0_i32, %c0_i32_0 : i32, i32
  }
  func.func @transform_3(%arg0: i32) -> (i32, i32) {
    %c0_i32 = arith.constant 0 : i32
    %c0_i32_0 = arith.constant 0 : i32
    %c0_i32_1 = arith.constant 0 : i32
    return %c0_i32, %c0_i32_0 : i32, i32
  }
  func.func @transform_4(%arg0: i32) -> (i32, i32) {
    %c0_i32 = arith.constant 0 : i32
    %c0_i32_0 = arith.constant 0 : i32
    %c0_i32_1 = arith.constant 0 : i32
    return %c0_i32, %c0_i32_0 : i32, i32
  }
  func.func @transform_5(%arg0: i32) -> (i32, i32) {
    %c0_i32 = arith.constant 0 : i32
    %c0_i32_0 = arith.constant 0 : i32
    return %arg0, %c0_i32 : i32, i32
  }
}

</mosaic_0001>

<llo_original>
// kernel: _forward_impl.2
$region0: #{_forward_impl.2}
  #allocation0 [shape = 'u32[]', space=smem, size = 0x4, offset = 0x4, fixed_abs, tag = 'smem constant byte address 0x4 - core index']
  #allocation1 [shape = 'u32[144,128]{1,0:T(1,128)}', space=vmem, size = 0x12000, scoped, tag = 'internal scratch']
  %s0 = inlined_call_operand.vmem [shape: bf16[128,27], index: 0, kind: input, shape index: {}]
  %s1 = inlined_call_operand.vmem [shape: bf16[27,32], index: 1, kind: input, shape index: {}]
  %s2 = inlined_call_operand.vmem [shape: f32[1,32], index: 2, kind: input, shape index: {}]
  %s3 = inlined_call_operand.vmem [shape: bf16[128,32], index: 3, kind: output, shape index: {}]
  %s4 = sld [smem:[#allocation0]]
  $region45: #{_forward_impl.2} parent=0
    _
  %s6 = ssub.s32 1, %s4
  %s7 = scalar_select 0, %s6, %s4
  loop: start=0, step=1, limit=4
  $region2: #{_forward_impl.2} parent=0 // loop_pre_header
    _
  $region3: #{_forward_impl.2} parent=0 // loop_header
    %s9 = sphi 0, %s13
    %p10 = scmp.ge.s32.totalorder %s9, 4
    %s19 = sphi 0, %s21
    %s22 = sphi 0, %s19
    %s23 = sphi 0, %s22
    %s39 = sphi 0, %s23
    %s43 = sphi 0, %s43
    %s45 = sphi 0, %s43
    %s46 = sphi 0, %s45
    %s60 = sphi 0, %s46
    %s64 = sphi 0, %s64
    %s66 = sphi 0, %s64
    %s67 = sphi 0, %s66
    %s81 = sphi 0, %s67
    %s87 = sphi 0, %s89
    %s90 = sphi 0, %s87
    %s91 = sphi 0, %s90
    %s107 = sphi 0, %s91
  $region4: #{_forward_impl.2} parent=0 // loop_header_branch
    %12 = sbr.rel (%p10) target = $region8
  $region5: #{_forward_impl.2} parent=0 // loop_body
    %s14 = ssub.s32 %s9, 1
    %s15 = ssub.s32 %s9, 2
    %s16 = sadd.s32 %s9, 1
    %s17 = ssub.s32 %s9, %s16
    %p18 = scmp.eq.s32.totalorder %s17, 0
    %s20 = sadd.s32 %s19, 1
    %s21 = scalar_select %p18, %s19, %s20
    %p24 = pneg %p18
    %p25 = scmp.eq.s32.totalorder %s9, 1
    %p26 = por %p24, %p25
    %p27 = scmp.ne.s32.totalorder %s19, %s22
    %p28 = scmp.eq.s32.totalorder %s9, 0
    %p29 = por %p27, %p28
    %p30 = scmp.ne.s32.totalorder %s19, %s22
    %p31 = scmp.eq.s32.totalorder %s14, 1
    %p32 = por %p30, %p31
    %p33 = scmp.ne.s32.totalorder %s22, %s23
    %p34 = scmp.eq.s32.totalorder %s14, 0
    %p35 = por %p33, %p34
    %p36 = scmp.ne.s32.totalorder %s22, %s23
    %p37 = scmp.eq.s32.totalorder %s15, 1
    %p38 = por %p36, %p37
    %p40 = scmp.ne.s32.totalorder %s23, %s39
    %p41 = scmp.eq.s32.totalorder %s15, 0
    %p42 = por %p40, %p41
    %s44 = sadd.s32 %s43, 1
    %p47 = scmp.eq.s32.totalorder %s9, 1
    %p48 = scmp.ne.s32.totalorder %s43, %s45
    %p49 = scmp.eq.s32.totalorder %s9, 0
    %p50 = por %p48, %p49
    %p51 = scmp.ne.s32.totalorder %s43, %s45
    %p52 = scmp.eq.s32.totalorder %s14, 1
    %p53 = por %p51, %p52
    %p54 = scmp.ne.s32.totalorder %s45, %s46
    %p55 = scmp.eq.s32.totalorder %s14, 0
    %p56 = por %p54, %p55
    %p57 = scmp.ne.s32.totalorder %s45, %s46
    %p58 = scmp.eq.s32.totalorder %s15, 1
    %p59 = por %p57, %p58
    %p61 = scmp.ne.s32.totalorder %s46, %s60
    %p62 = scmp.eq.s32.totalorder %s15, 0
    %p63 = por %p61, %p62
    %s65 = sadd.s32 %s64, 1
    %p68 = scmp.eq.s32.totalorder %s9, 1
    %p69 = scmp.ne.s32.totalorder %s64, %s66
    %p70 = scmp.eq.s32.totalorder %s9, 0
    %p71 = por %p69, %p70
    %p72 = scmp.ne.s32.totalorder %s64, %s66
    %p73 = scmp.eq.s32.totalorder %s14, 1
    %p74 = por %p72, %p73
    %p75 = scmp.ne.s32.totalorder %s66, %s67
    %p76 = scmp.eq.s32.totalorder %s14, 0
    %p77 = por %p75, %p76
    %p78 = scmp.ne.s32.totalorder %s66, %s67
    %p79 = scmp.eq.s32.totalorder %s15, 1
    %p80 = por %p78, %p79
    %p82 = scmp.ne.s32.totalorder %s67, %s81
    %p83 = scmp.eq.s32.totalorder %s15, 0
    %p84 = por %p82, %p83
    %s85 = ssub.s32 %s9, %s16
    %p86 = scmp.eq.s32.totalorder %s85, 0
    %s88 = sadd.s32 %s87, 1
    %s89 = scalar_select %p86, %s87, %s88
    %p92 = pneg %p86
    %p93 = scmp.eq.s32.totalorder %s9, 1
    %p94 = por %p92, %p93
    %p95 = scmp.ne.s32.totalorder %s87, %s90
    %p96 = scmp.eq.s32.totalorder %s9, 0
    %p97 = por %p95, %p96
    %p98 = scmp.ne.s32.totalorder %s87, %s90
    %p99 = scmp.eq.s32.totalorder %s14, 1
    %p100 = por %p98, %p99
    %p101 = scmp.ne.s32.totalorder %s90, %s91
    %p102 = scmp.eq.s32.totalorder %s14, 0
    %p103 = por %p101, %p102
    %p104 = scmp.ne.s32.totalorder %s90, %s91
    %p105 = scmp.eq.s32.totalorder %s15, 1
    %p106 = por %p104, %p105
    %p108 = scmp.ne.s32.totalorder %s91, %s107
    %p109 = scmp.eq.s32.totalorder %s15, 0
    %p110 = por %p108, %p109
    %p111 = scmp.le.s32.totalorder 1, %s9
    %p112 = scmp.lt.s32.totalorder %s9, 3
    %p113 = pnand %p111, %p112
    %p114 = pneg %p113
    // Predicated region
    $region9: #{_forward_impl.2} parent=5 // pred_check
      _
    $region10: #{_forward_impl.2} parent=5 // pred_check_branch
      %116 = sbr.rel (%p113) target = $region12
    $region11: #{_forward_impl.2} parent=5 // pred_region
      %s117 = ssub.s32 %s9, 1
      // Predicated region
      $region13: #{_forward_impl.2} parent=11 // pred_check
        %p118 = pneg %p56
      $region14: #{_forward_impl.2} parent=11 // pred_check_branch
        %120 = sbr.rel (%p118) target = $region16
      $region15: #{_forward_impl.2} parent=11 // pred_region
        _
      $region16: #{_forward_impl.2} parent=11 // pred_fallthru
        _
      // Predicated region
      $region17: #{_forward_impl.2} parent=11 // pred_check
        %p121 = pneg %p77
      $region18: #{_forward_impl.2} parent=11 // pred_check_branch
        %123 = sbr.rel (%p121) target = $region20
      $region19: #{_forward_impl.2} parent=11 // pred_region
        _
      $region20: #{_forward_impl.2} parent=11 // pred_fallthru
        _
    $region12: #{_forward_impl.2} parent=5 // pred_fallthru
      _
    %p124 = scmp.lt.s32.totalorder %s9, 2
    // Predicated region
    $region21: #{_forward_impl.2} parent=5 // pred_check
      %p125 = pneg %p124
    $region22: #{_forward_impl.2} parent=5 // pred_check_branch
      %127 = sbr.rel (%p125) target = $region24
    $region23: #{_forward_impl.2} parent=5 // pred_region
      // Predicated region
      $region25: #{_forward_impl.2} parent=23 // pred_check
        %p128 = pneg %p29
      $region26: #{_forward_impl.2} parent=23 // pred_check_branch
        %130 = sbr.rel (%p128) target = $region28
      $region27: #{_forward_impl.2} parent=23 // pred_region
        %s131 = smul.u32 8, %s9
        %p132 = scmp.lt.s32.totalorder %s131, 15
        %s133 = scalar_select %p132, %s131, 15
        %s134 = smul.addr %s133, 4
        %s135 = scalar_lea.vmem %s0, %s134
        %s136 = smul.u32 8, %s9
      $region28: #{_forward_impl.2} parent=23 // pred_fallthru
        _
    $region24: #{_forward_impl.2} parent=5 // pred_fallthru
      _
    %p137 = scmp.le.s32.totalorder 1, %s9
    %p138 = scmp.lt.s32.totalorder %s9, 3
    %p139 = pnand %p137, %p138
    %p140 = pneg %p139
    // Predicated region
    $region29: #{_forward_impl.2} parent=5 // pred_check
      _
    $region30: #{_forward_impl.2} parent=5 // pred_check_branch
      %142 = sbr.rel (%p139) target = $region32
    $region31: #{_forward_impl.2} parent=5 // pred_region
      %s143 = ssub.s32 %s9, 1
      %s144 = smul.u32 8, %s14
      %p145 = scmp.lt.s32.totalorder %s144, 15
      %s146 = scalar_select %p145, %s144, 15
      %s147 = smul.addr %s146, 4
      %s148 = scalar_lea.vmem %s0, %s147
      %p149 = pneg %p35
      %p150 = pneg %p32
      %p151 = pneg %p56
      %p152 = pneg %p53
      %p153 = pneg %p77
      %p154 = pneg %p74
      %p155 = pneg %p103
      %p156 = pneg %p100
      %s157 = smul.u32 8, %s14
      %p158 = scmp.lt.s32.totalorder %s157, 15
      %s159 = scalar_select %p158, %s157, 15
      %s160 = smul.addr %s159, 4
      %s161 = scalar_lea.vmem %s3, %s160
      %s162 = smul.u32 8, %s14
      %p163 = scmp.lt.s32.totalorder %s162, 15
      %s164 = scalar_select %p163, %s162, 15
      %s165 = smul.addr %s164, 4
      %s166 = scalar_lea.vmem %s0, %s165
      %s167 = smul.u32 8, %s14
      %s168 = smul.u32 8, %s14
      %p169 = scmp.lt.s32.totalorder %s168, 15
      %s170 = scalar_select %p169, %s168, 15
      %s171 = smul.addr %s170, 4
      %s172 = scalar_lea.vmem %s3, %s171
      %s173 = smul.u32 8, %s14
      %v175 = vld [vmem:[%s166] sm:$0xf]
      %v176 = vld [vmem:[%s166 + $0x4] sm:$0xf]
      %v177 = vld [vmem:[%s166 + $0x8] sm:$0xf]
      %v178 = vld [vmem:[%s166 + $0xc] sm:$0xf]
      %v179 = vld [vmem:[%s166 + $0x10] sm:$0xf]
      %v180 = vld [vmem:[%s166 + $0x14] sm:$0xf]
      %v181 = vld [vmem:[%s166 + $0x18] sm:$0xf]
      %v182 = vld [vmem:[%s166 + $0x1c] sm:$0xf]
      %v183 = vld [vmem:[%s1] sm:$0xf]
      %v184 = vld [vmem:[%s1 + $0x4] sm:$0xf]
      %v185 = vld [vmem:[%s1 + $0x8] sm:$0xf]
      %v186 = vld [vmem:[%s1 + $0xc] sm:$0x3]
      %v187 = vld [vmem:[%s2] sm:$0x1]
      %v189 = vlaneseq
      %v190 = vshrl.u32 %v189, 7
      %v191 = vsub.s32 0, %v190
      %v192 = vrot.slane %v187, %v191
      %v202 = vunpack.c.l.b16 %v175
      %v203 = vunpack.c.l.b16 %v176
      %v204 = vunpack.c.l.b16 %v177
      %v205 = vunpack.c.l.b16 %v178
      %v206 = vunpack.c.l.b16 %v179
      %v207 = vunpack.c.l.b16 %v180
      %v208 = vunpack.c.l.b16 %v181
      %v209 = vunpack.c.l.b16 %v182
      %v210 = vpack.c.b16 %v203, %v202
      %v211 = vpack.c.b16 %v205, %v204
      %v212 = vpack.c.b16 %v207, %v206
      %v213 = vpack.c.b16 %v209, %v208
      %v218 = vunpack.c.l.b16 %v183
      %v219 = vunpack.c.l.b16 %v184
      %v220 = vunpack.c.l.b16 %v185
      %v221 = vunpack.c.l.b16 %v186
      %v222 = vpack.c.b16 %v219, %v218
      %v223 = vpack.c.b16 %v221, %v220
      %vm225 = vcmask 220160
      %v227 = vsel %vm225, %v210, 0
      %v230 = vsel %vm225, %v211, 0
      %v233 = vsel %vm225, %v212, 0
      %v236 = vsel %vm225, %v213, 0
      %vm238 = vcmask 1044480
      %vm239 = vcmask 1045504
      %v240 = vsel %vm238, 4294967295, 65535
      %v241 = vsel %vm239, %v240, 0
      %v243 = vand.u32 %v223, %v241
      %245 = vmatprep.subr.bf16.mxu0 0
      %246 = vmatpush1.bf16.msra.mxu0 %v222
      %247 = vmatprep.subr.bf16.mxu0 0
      %248 = vmatpush1.bf16.msra.mxu0 %v243
      %249 = vmatprep.subr.bf16.mxu0 0
      %250 = vmatpush1.bf16.msra.mxu0 0
      %251 = vmatprep.subr.bf16.mxu0 0
      %252 = vmatpush1.bf16.msra.mxu0 0
      %253 = vmatprep.subr.bf16.mxu0 0
      %254 = vmatpush1.bf16.msra.mxu0 0
      %255 = vmatprep.subr.bf16.mxu0 0
      %256 = vmatpush1.bf16.msra.mxu0 0
      %257 = vmatprep.subr.bf16.mxu0 0
      %258 = vmatpush1.bf16.msra.mxu0 0
      %259 = vmatprep.subr.bf16.mxu0 0
      %260 = vmatpush1.bf16.msra.mxu0 0
      %261 = vmatprep.subr.bf16.mxu0 0
      %262 = vmatpush1.bf16.msra.mxu0 0
      %263 = vmatprep.subr.bf16.mxu0 0
      %264 = vmatpush1.bf16.msra.mxu0 0
      %265 = vmatprep.subr.bf16.mxu0 0
      %266 = vmatpush1.bf16.msra.mxu0 0
      %267 = vmatprep.subr.bf16.mxu0 0
      %268 = vmatpush1.bf16.msra.mxu0 0
      %269 = vmatprep.subr.bf16.mxu0 0
      %270 = vmatpush1.bf16.msra.mxu0 0
      %271 = vmatprep.subr.bf16.mxu0 0
      %272 = vmatpush1.bf16.msra.mxu0 0
      %273 = vmatprep.subr.bf16.mxu0 0
      %274 = vmatpush1.bf16.msra.mxu0 0
      %275 = vmatprep.subr.bf16.mxu0 0
      %276 = vmatpush1.bf16.msra.mxu0 0
      %277 = vmatprep.mubr.bf16.mxu0 0
      %278 = vmatmul.mubr.bf16.gmra.mrb[0].mxu0 %v227
      %v279 = vpop.f32.mrb[0].mxu0
      %v280 = vadd.f32 %v192, %v279
      %v281 = vpop.f32.mrb[0].mxu0
      %v282 = vpop.f32.mrb[0].mxu0
      %v283 = vadd.f32 %v192, %v282
      %v284 = vpop.f32.mrb[0].mxu0
      %285 = vmatprep.mubr.bf16.mxu0 0
      %286 = vmatmul.mubr.bf16.gmra.mrb[0].mxu0 %v230
      %v287 = vpop.f32.mrb[0].mxu0
      %v288 = vadd.f32 %v192, %v287
      %v289 = vpop.f32.mrb[0].mxu0
      %v290 = vpop.f32.mrb[0].mxu0
      %v291 = vadd.f32 %v192, %v290
      %v292 = vpop.f32.mrb[0].mxu0
      %293 = vmatprep.mubr.bf16.mxu0 0
      %294 = vmatmul.mubr.bf16.gmra.mrb[0].mxu0 %v233
      %v295 = vpop.f32.mrb[0].mxu0
      %v296 = vadd.f32 %v192, %v295
      %v297 = vpop.f32.mrb[0].mxu0
      %v298 = vpop.f32.mrb[0].mxu0
      %v299 = vadd.f32 %v192, %v298
      %v300 = vpop.f32.mrb[0].mxu0
      %301 = vmatprep.mubr.bf16.mxu0 0
      %302 = vmatmul.mubr.bf16.gmra.mrb[0].mxu0 %v236
      %v303 = vpop.f32.mrb[0].mxu0
      %v304 = vadd.f32 %v192, %v303
      %v305 = vpop.f32.mrb[0].mxu0
      %v306 = vpop.f32.mrb[0].mxu0
      %v307 = vadd.f32 %v192, %v306
      %v308 = vpop.f32.mrb[0].mxu0
      %309 = vdwg.mxu0
      %v310 = vmax.f32 %v280, 0.0
      %v311 = vmax.f32 %v283, 0.0
      %v312 = vmax.f32 %v288, 0.0
      %v313 = vmax.f32 %v291, 0.0
      %v314 = vmax.f32 %v296, 0.0
      %v315 = vmax.f32 %v299, 0.0
      %v316 = vmax.f32 %v304, 0.0
      %v317 = vmax.f32 %v307, 0.0
      %v318 = vpack.c.bf16 %v311, %v310
      %v319 = vpack.c.bf16 %v313, %v312
      %v320 = vpack.c.bf16 %v315, %v314
      %v321 = vpack.c.bf16 %v317, %v316
      %v326 = vunpack.c.l.b16 %v318
      %v327 = vunpack.c.h.b16 %v318
      %v328 = vunpack.c.l.b16 %v319
      %v329 = vunpack.c.h.b16 %v319
      %v330 = vunpack.c.l.b16 %v320
      %v331 = vunpack.c.h.b16 %v320
      %v332 = vunpack.c.l.b16 %v321
      %v333 = vunpack.c.h.b16 %v321
      %v334 = vpack.c.b16 %v326, %v326
      %v335 = vpack.c.b16 %v327, %v327
      %v336 = vpack.c.b16 %v328, %v328
      %v337 = vpack.c.b16 %v329, %v329
      %v338 = vpack.c.b16 %v330, %v330
      %v339 = vpack.c.b16 %v331, %v331
      %v340 = vpack.c.b16 %v332, %v332
      %v341 = vpack.c.b16 %v333, %v333
      %vm350 = vcmask 257024
      %351 = vst.msk [vmem:[%s172] sm:$0xf] %vm350, %v334
      %352 = vst.msk [vmem:[%s172 + $0x4] sm:$0xf] %vm350, %v335
      %353 = vst.msk [vmem:[%s172 + $0x8] sm:$0xf] %vm350, %v336
      %354 = vst.msk [vmem:[%s172 + $0xc] sm:$0xf] %vm350, %v337
      %355 = vst.msk [vmem:[%s172 + $0x10] sm:$0xf] %vm350, %v338
      %356 = vst.msk [vmem:[%s172 + $0x14] sm:$0xf] %vm350, %v339
      %357 = vst.msk [vmem:[%s172 + $0x18] sm:$0xf] %vm350, %v340
      %358 = vst.msk [vmem:[%s172 + $0x1c] sm:$0xf] %vm350, %v341
      %s359 = smul.u32 8, %s14
      %p360 = scmp.lt.s32.totalorder %s359, 15
      %s361 = scalar_select %p360, %s359, 15
      %s362 = smul.addr %s361, 4
      %s363 = scalar_lea.vmem %s3, %s362
      // Predicated region
      $region33: #{_forward_impl.2} parent=31 // pred_check
        %p364 = pneg %p100
      $region34: #{_forward_impl.2} parent=31 // pred_check_branch
        %366 = sbr.rel (%p364) target = $region36
      $region35: #{_forward_impl.2} parent=31 // pred_region
        %s367 = smul.u32 8, %s14
      $region36: #{_forward_impl.2} parent=31 // pred_fallthru
        _
    $region32: #{_forward_impl.2} parent=5 // pred_fallthru
      _
    %p368 = scmp.le.s32.totalorder 2, %s9
    // Predicated region
    $region37: #{_forward_impl.2} parent=5 // pred_check
      %p369 = pneg %p368
    $region38: #{_forward_impl.2} parent=5 // pred_check_branch
      %371 = sbr.rel (%p369) target = $region40
    $region39: #{_forward_impl.2} parent=5 // pred_region
      %s372 = ssub.s32 %s9, 2
      // Predicated region
      $region41: #{_forward_impl.2} parent=39 // pred_check
        %p373 = pneg %p106
      $region42: #{_forward_impl.2} parent=39 // pred_check_branch
        %375 = sbr.rel (%p373) target = $region44
      $region43: #{_forward_impl.2} parent=39 // pred_region
        %s376 = smul.u32 8, %s15
        %p377 = scmp.lt.s32.totalorder %s376, 15
        %s378 = scalar_select %p377, %s376, 15
        %s379 = smul.addr %s378, 4
        %s380 = scalar_lea.vmem %s3, %s379
      $region44: #{_forward_impl.2} parent=39 // pred_fallthru
        _
    $region40: #{_forward_impl.2} parent=5 // pred_fallthru
      _
  $region6: #{_forward_impl.2} parent=0 // loop_footer
    %s13 = sadd.s32 1, %s9
  $region7: #{_forward_impl.2} parent=0 // loop_footer_branch
    %8 = sbr.rel target = $region3
  $region8: #{_forward_impl.2} parent=0 // loop_exit
    _

// kernel: _forward_impl.3
$region0: #{_forward_impl.3}
  #allocation0 [shape = 'u32[]', space=smem, size = 0x4, offset = 0x4, fixed_abs, tag = 'smem constant byte address 0x4 - core index']
  #allocation1 [shape = 'u32[144,128]{1,0:T(1,128)}', space=vmem, size = 0x12000, scoped, tag = 'internal scratch']
  %s0 = inlined_call_operand.vmem [shape: bf16[32,288], index: 0, kind: input, shape index: {}]
  %s1 = inlined_call_operand.vmem [shape: bf16[288,64], index: 1, kind: input, shape index: {}]
  %s2 = inlined_call_operand.vmem [shape: f32[1,64], index: 2, kind: input, shape index: {}]
  %s3 = inlined_call_operand.vmem [shape: bf16[64,16], index: 3, kind: input, shape index: {}]
  %s4 = inlined_call_operand.vmem [shape: f32[1,16], index: 4, kind: input, shape index: {}]
  %s5 = inlined_call_operand.hbm [shape: f32[32,16], index: 5, kind: output, shape index: {}]
  %s6 = sld [smem:[#allocation0]]
  $region53: #{_forward_impl.3} parent=0
    _
  %s8 = ssub.s32 1, %s6
  %s9 = scalar_select 0, %s8, %s6
  $region1: #{_forward_impl.3} parent=0
    #allocation2 [shape = 'u8[16384]{0}', space=vmem, size = 0x4000, scoped, tag = 'output window, operand 0']
    #allocation3 [shape = 's32[2]{0}', space=sflag, size = 0x8, scoped, tag = 'scoped memory for _forward_impl.3']
    %10 = vsyncpa [#allocation3], 0
    %s11 = scalar_lea.sflag [#allocation3], 1
    %12 = vsyncpa %s11, 0
    loop: start=0, step=1, limit=4
    $region2: #{_forward_impl.3} parent=1 // loop_pre_header
      _
    $region3: #{_forward_impl.3} parent=1 // loop_header
      %s14 = sphi 0, %s18
      %p15 = scmp.ge.s32.totalorder %s14, 4
      %s24 = sphi 0, %s26
      %s27 = sphi 0, %s24
      %s28 = sphi 0, %s27
      %s44 = sphi 0, %s28
      %s48 = sphi 0, %s48
      %s50 = sphi 0, %s48
      %s51 = sphi 0, %s50
      %s65 = sphi 0, %s51
      %s69 = sphi 0, %s69
      %s71 = sphi 0, %s69
      %s72 = sphi 0, %s71
      %s86 = sphi 0, %s72
      %s90 = sphi 0, %s90
      %s92 = sphi 0, %s90
      %s93 = sphi 0, %s92
      %s107 = sphi 0, %s93
      %s111 = sphi 0, %s111
      %s113 = sphi 0, %s111
      %s114 = sphi 0, %s113
      %s128 = sphi 0, %s114
      %s134 = sphi 0, %s136
      %s137 = sphi 0, %s134
      %s138 = sphi 0, %s137
      %s154 = sphi 0, %s138
    $region4: #{_forward_impl.3} parent=1 // loop_header_branch
      %17 = sbr.rel (%p15) target = $region8
    $region5: #{_forward_impl.3} parent=1 // loop_body
      %s19 = ssub.s32 %s14, 1
      %s20 = ssub.s32 %s14, 2
      %s21 = sadd.s32 %s14, 1
      %s22 = ssub.s32 %s14, %s21
      %p23 = scmp.eq.s32.totalorder %s22, 0
      %s25 = sadd.s32 %s24, 1
      %s26 = scalar_select %p23, %s24, %s25
      %p29 = pneg %p23
      %p30 = scmp.eq.s32.totalorder %s14, 1
      %p31 = por %p29, %p30
      %p32 = scmp.ne.s32.totalorder %s24, %s27
      %p33 = scmp.eq.s32.totalorder %s14, 0
      %p34 = por %p32, %p33
      %p35 = scmp.ne.s32.totalorder %s24, %s27
      %p36 = scmp.eq.s32.totalorder %s19, 1
      %p37 = por %p35, %p36
      %p38 = scmp.ne.s32.totalorder %s27, %s28
      %p39 = scmp.eq.s32.totalorder %s19, 0
      %p40 = por %p38, %p39
      %p41 = scmp.ne.s32.totalorder %s27, %s28
      %p42 = scmp.eq.s32.totalorder %s20, 1
      %p43 = por %p41, %p42
      %p45 = scmp.ne.s32.totalorder %s28, %s44
      %p46 = scmp.eq.s32.totalorder %s20, 0
      %p47 = por %p45, %p46
      %s49 = sadd.s32 %s48, 1
      %p52 = scmp.eq.s32.totalorder %s14, 1
      %p53 = scmp.ne.s32.totalorder %s48, %s50
      %p54 = scmp.eq.s32.totalorder %s14, 0
      %p55 = por %p53, %p54
      %p56 = scmp.ne.s32.totalorder %s48, %s50
      %p57 = scmp.eq.s32.totalorder %s19, 1
      %p58 = por %p56, %p57
      %p59 = scmp.ne.s32.totalorder %s50, %s51
      %p60 = scmp.eq.s32.totalorder %s19, 0
      %p61 = por %p59, %p60
      %p62 = scmp.ne.s32.totalorder %s50, %s51
      %p63 = scmp.eq.s32.totalorder %s20, 1
      %p64 = por %p62, %p63
      %p66 = scmp.ne.s32.totalorder %s51, %s65
      %p67 = scmp.eq.s32.totalorder %s20, 0
      %p68 = por %p66, %p67
      %s70 = sadd.s32 %s69, 1
      %p73 = scmp.eq.s32.totalorder %s14, 1
      %p74 = scmp.ne.s32.totalorder %s69, %s71
      %p75 = scmp.eq.s32.totalorder %s14, 0
      %p76 = por %p74, %p75
      %p77 = scmp.ne.s32.totalorder %s69, %s71
      %p78 = scmp.eq.s32.totalorder %s19, 1
      %p79 = por %p77, %p78
      %p80 = scmp.ne.s32.totalorder %s71, %s72
      %p81 = scmp.eq.s32.totalorder %s19, 0
      %p82 = por %p80, %p81
      %p83 = scmp.ne.s32.totalorder %s71, %s72
      %p84 = scmp.eq.s32.totalorder %s20, 1
      %p85 = por %p83, %p84
      %p87 = scmp.ne.s32.totalorder %s72, %s86
      %p88 = scmp.eq.s32.totalorder %s20, 0
      %p89 = por %p87, %p88
      %s91 = sadd.s32 %s90, 1
      %p94 = scmp.eq.s32.totalorder %s14, 1
      %p95 = scmp.ne.s32.totalorder %s90, %s92
      %p96 = scmp.eq.s32.totalorder %s14, 0
      %p97 = por %p95, %p96
      %p98 = scmp.ne.s32.totalorder %s90, %s92
      %p99 = scmp.eq.s32.totalorder %s19, 1
      %p100 = por %p98, %p99
      %p101 = scmp.ne.s32.totalorder %s92, %s93
      %p102 = scmp.eq.s32.totalorder %s19, 0
      %p103 = por %p101, %p102
      %p104 = scmp.ne.s32.totalorder %s92, %s93
      %p105 = scmp.eq.s32.totalorder %s20, 1
      %p106 = por %p104, %p105
      %p108 = scmp.ne.s32.totalorder %s93, %s107
      %p109 = scmp.eq.s32.totalorder %s20, 0
      %p110 = por %p108, %p109
      %s112 = sadd.s32 %s111, 1
      %p115 = scmp.eq.s32.totalorder %s14, 1
      %p116 = scmp.ne.s32.totalorder %s111, %s113
      %p117 = scmp.eq.s32.totalorder %s14, 0
      %p118 = por %p116, %p117
      %p119 = scmp.ne.s32.totalorder %s111, %s113
      %p120 = scmp.eq.s32.totalorder %s19, 1
      %p121 = por %p119, %p120
      %p122 = scmp.ne.s32.totalorder %s113, %s114
      %p123 = scmp.eq.s32.totalorder %s19, 0
      %p124 = por %p122, %p123
      %p125 = scmp.ne.s32.totalorder %s113, %s114
      %p126 = scmp.eq.s32.totalorder %s20, 1
      %p127 = por %p125, %p126
      %p129 = scmp.ne.s32.totalorder %s114, %s128
      %p130 = scmp.eq.s32.totalorder %s20, 0
      %p131 = por %p129, %p130
      %s132 = ssub.s32 %s14, %s21
      %p133 = scmp.eq.s32.totalorder %s132, 0
      %s135 = sadd.s32 %s134, 1
      %s136 = scalar_select %p133, %s134, %s135
      %p139 = pneg %p133
      %p140 = scmp.eq.s32.totalorder %s14, 1
      %p141 = por %p139, %p140
      %p142 = scmp.ne.s32.totalorder %s134, %s137
      %p143 = scmp.eq.s32.totalorder %s14, 0
      %p144 = por %p142, %p143
      %p145 = scmp.ne.s32.totalorder %s134, %s137
      %p146 = scmp.eq.s32.totalorder %s19, 1
      %p147 = por %p145, %p146
      %p148 = scmp.ne.s32.totalorder %s137, %s138
      %p149 = scmp.eq.s32.totalorder %s19, 0
      %p150 = por %p148, %p149
      %p151 = scmp.ne.s32.totalorder %s137, %s138
      %p152 = scmp.eq.s32.totalorder %s20, 1
      %p153 = por %p151, %p152
      %p155 = scmp.ne.s32.totalorder %s138, %s154
      %p156 = scmp.eq.s32.totalorder %s20, 0
      %p157 = por %p155, %p156
      %p158 = scmp.le.s32.totalorder 1, %s14
      %p159 = scmp.lt.s32.totalorder %s14, 3
      %p160 = pnand %p158, %p159
      %p161 = pneg %p160
      // Predicated region
      $region9: #{_forward_impl.3} parent=5 // pred_check
        _
      $region10: #{_forward_impl.3} parent=5 // pred_check_branch
        %163 = sbr.rel (%p160) target = $region12
      $region11: #{_forward_impl.3} parent=5 // pred_region
        %s164 = ssub.s32 %s14, 1
        // Predicated region
        $region13: #{_forward_impl.3} parent=11 // pred_check
          %p165 = pneg %p61
        $region14: #{_forward_impl.3} parent=11 // pred_check_branch
          %167 = sbr.rel (%p165) target = $region16
        $region15: #{_forward_impl.3} parent=11 // pred_region
          _
        $region16: #{_forward_impl.3} parent=11 // pred_fallthru
          _
        // Predicated region
        $region17: #{_forward_impl.3} parent=11 // pred_check
          %p168 = pneg %p82
        $region18: #{_forward_impl.3} parent=11 // pred_check_branch
          %170 = sbr.rel (%p168) target = $region20
        $region19: #{_forward_impl.3} parent=11 // pred_region
          _
        $region20: #{_forward_impl.3} parent=11 // pred_fallthru
          _
        // Predicated region
        $region21: #{_forward_impl.3} parent=11 // pred_check
          %p171 = pneg %p103
        $region22: #{_forward_impl.3} parent=11 // pred_check_branch
          %173 = sbr.rel (%p171) target = $region24
        $region23: #{_forward_impl.3} parent=11 // pred_region
          _
        $region24: #{_forward_impl.3} parent=11 // pred_fallthru
          _
        // Predicated region
        $region25: #{_forward_impl.3} parent=11 // pred_check
          %p174 = pneg %p124
        $region26: #{_forward_impl.3} parent=11 // pred_check_branch
          %176 = sbr.rel (%p174) target = $region28
        $region27: #{_forward_impl.3} parent=11 // pred_region
          _
        $region28: #{_forward_impl.3} parent=11 // pred_fallthru
          _
      $region12: #{_forward_impl.3} parent=5 // pred_fallthru
        _
      %p177 = scmp.lt.s32.totalorder %s14, 2
      // Predicated region
      $region29: #{_forward_impl.3} parent=5 // pred_check
        %p178 = pneg %p177
      $region30: #{_forward_impl.3} parent=5 // pred_check_branch
        %180 = sbr.rel (%p178) target = $region32
      $region31: #{_forward_impl.3} parent=5 // pred_region
        // Predicated region
        $region33: #{_forward_impl.3} parent=31 // pred_check
          %p181 = pneg %p34
        $region34: #{_forward_impl.3} parent=31 // pred_check_branch
          %183 = sbr.rel (%p181) target = $region36
        $region35: #{_forward_impl.3} parent=31 // pred_region
          %s184 = smul.u32 2, %s14
          %p185 = scmp.lt.s32.totalorder %s184, 3
          %s186 = scalar_select %p185, %s184, 3
          %s187 = smul.addr %s186, 3
          %s188 = smul.addr %s187, 4
          %s189 = scalar_lea.vmem %s0, %s188
          %s190 = smul.u32 2, %s14
        $region36: #{_forward_impl.3} parent=31 // pred_fallthru
          _
      $region32: #{_forward_impl.3} parent=5 // pred_fallthru
        _
      %p191 = scmp.le.s32.totalorder 1, %s14
      %p192 = scmp.lt.s32.totalorder %s14, 3
      %p193 = pnand %p191, %p192
      %p194 = pneg %p193
      // Predicated region
      $region37: #{_forward_impl.3} parent=5 // pred_check
        _
      $region38: #{_forward_impl.3} parent=5 // pred_check_branch
        %196 = sbr.rel (%p193) target = $region40
      $region39: #{_forward_impl.3} parent=5 // pred_region
        %s197 = ssub.s32 %s14, 1
        %s198 = smul.u32 2, %s19
        %p199 = scmp.lt.s32.totalorder %s198, 3
        %s200 = scalar_select %p199, %s198, 3
        %s201 = smul.addr %s200, 3
        %s202 = smul.addr %s201, 4
        %s203 = scalar_lea.vmem %s0, %s202
        %p204 = pneg %p40
        %p205 = pneg %p37
        %p206 = pneg %p61
        %p207 = pneg %p58
        %p208 = pneg %p82
        %p209 = pneg %p79
        %p210 = pneg %p103
        %p211 = pneg %p100
        %p212 = pneg %p124
        %p213 = pneg %p121
        %p214 = pneg %p150
        %p215 = pneg %p147
        %s216 = sand.u32 %s137, 1
        %s217 = scalar_lea.sflag [#allocation3], %s216
        %s218 = sand.u32 %s137, 1
        %s219 = smul.addr %s218, 16
        %s220 = scalar_lea.vmem [#allocation2], %s219
        %s221 = smul.u32 2, %s19
        %p222 = scmp.lt.s32.totalorder %s221, 3
        %s223 = scalar_select %p222, %s221, 3
        %s224 = smul.addr %s223, 3
        %s225 = smul.addr %s224, 4
        %s226 = scalar_lea.vmem %s0, %s225
        %s227 = smul.u32 2, %s19
        %s228 = smul.u32 2, %s19
        %v230 = vld [vmem:[%s226] sm:$0xff]
        %v231 = vld [vmem:[%s226 + $0x8] sm:$0xf]
        %v232 = vld [vmem:[%s226 + $0xc] sm:$0xff]
        %v233 = vld [vmem:[%s226 + $0x14] sm:$0xf]
        %v234 = vld [vmem:[%s1] sm:$0xf]
        %v235 = vld [vmem:[%s1 + $0x4] sm:$0xf]
        %v236 = vld [vmem:[%s1 + $0x8] sm:$0xf]
        %v237 = vld [vmem:[%s1 + $0xc] sm:$0xf]
        %v238 = vld [vmem:[%s1 + $0x10] sm:$0xf]
        %v239 = vld [vmem:[%s1 + $0x14] sm:$0xf]
        %v240 = vld [vmem:[%s1 + $0x18] sm:$0xf]
        %v241 = vld [vmem:[%s1 + $0x1c] sm:$0xf]
        %v242 = vld [vmem:[%s1 + $0x20] sm:$0xf]
        %v243 = vld [vmem:[%s1 + $0x24] sm:$0xf]
        %v244 = vld [vmem:[%s1 + $0x28] sm:$0xf]
        %v245 = vld [vmem:[%s1 + $0x2c] sm:$0xf]
        %v246 = vld [vmem:[%s1 + $0x30] sm:$0xf]
        %v247 = vld [vmem:[%s1 + $0x34] sm:$0xf]
        %v248 = vld [vmem:[%s1 + $0x38] sm:$0xf]
        %v249 = vld [vmem:[%s1 + $0x3c] sm:$0xf]
        %v250 = vld [vmem:[%s1 + $0x40] sm:$0xf]
        %v251 = vld [vmem:[%s1 + $0x44] sm:$0xf]
        %v252 = vld [vmem:[%s1 + $0x48] sm:$0xf]
        %v253 = vld [vmem:[%s1 + $0x4c] sm:$0xf]
        %v254 = vld [vmem:[%s1 + $0x50] sm:$0xf]
        %v255 = vld [vmem:[%s1 + $0x54] sm:$0xf]
        %v256 = vld [vmem:[%s1 + $0x58] sm:$0xf]
        %v257 = vld [vmem:[%s1 + $0x5c] sm:$0xf]
        %v258 = vld [vmem:[%s1 + $0x60] sm:$0xf]
        %v259 = vld [vmem:[%s1 + $0x64] sm:$0xf]
        %v260 = vld [vmem:[%s1 + $0x68] sm:$0xf]
        %v261 = vld [vmem:[%s1 + $0x6c] sm:$0xf]
        %v262 = vld [vmem:[%s1 + $0x70] sm:$0xf]
        %v263 = vld [vmem:[%s1 + $0x74] sm:$0xf]
        %v264 = vld [vmem:[%s1 + $0x78] sm:$0xf]
        %v265 = vld [vmem:[%s1 + $0x7c] sm:$0xf]
        %v266 = vld [vmem:[%s1 + $0x80] sm:$0xf]
        %v267 = vld [vmem:[%s1 + $0x84] sm:$0xf]
        %v268 = vld [vmem:[%s1 + $0x88] sm:$0xf]
        %v269 = vld [vmem:[%s1 + $0x8c] sm:$0xf]
        %v270 = vld [vmem:[%s2] sm:$0x1]
        %v272 = vlaneseq
        %v273 = vshrl.u32 %v272, 7
        %v274 = vsub.s32 0, %v273
        %v275 = vrot.slane %v270, %v274
        %v281 = vunpack.c.l.b16 %v230
        %v282 = vunpack.c.h.b16 %v230
        %v283 = vunpack.c.l.b16 %v231
        %v284 = vunpack.c.l.b16 %v232
        %v285 = vunpack.c.h.b16 %v232
        %v286 = vunpack.c.l.b16 %v233
        %v287 = vpack.c.b16 %v284, %v281
        %v288 = vpack.c.b16 %v285, %v282
        %v289 = vpack.c.b16 %v286, %v283
        %v328 = vunpack.c.l.b16 %v234
        %v329 = vunpack.c.l.b16 %v235
        %v330 = vunpack.c.l.b16 %v236
        %v331 = vunpack.c.l.b16 %v237
        %v332 = vunpack.c.l.b16 %v238
        %v333 = vunpack.c.l.b16 %v239
        %v334 = vunpack.c.l.b16 %v240
        %v335 = vunpack.c.l.b16 %v241
        %v336 = vunpack.c.l.b16 %v242
        %v337 = vunpack.c.l.b16 %v243
        %v338 = vunpack.c.l.b16 %v244
        %v339 = vunpack.c.l.b16 %v245
        %v340 = vunpack.c.l.b16 %v246
        %v341 = vunpack.c.l.b16 %v247
        %v342 = vunpack.c.l.b16 %v248
        %v343 = vunpack.c.l.b16 %v249
        %v344 = vunpack.c.l.b16 %v250
        %v345 = vunpack.c.l.b16 %v251
        %v346 = vunpack.c.l.b16 %v252
        %v347 = vunpack.c.l.b16 %v253
        %v348 = vunpack.c.l.b16 %v254
        %v349 = vunpack.c.l.b16 %v255
        %v350 = vunpack.c.l.b16 %v256
        %v351 = vunpack.c.l.b16 %v257
        %v352 = vunpack.c.l.b16 %v258
        %v353 = vunpack.c.l.b16 %v259
        %v354 = vunpack.c.l.b16 %v260
        %v355 = vunpack.c.l.b16 %v261
        %v356 = vunpack.c.l.b16 %v262
        %v357 = vunpack.c.l.b16 %v263
        %v358 = vunpack.c.l.b16 %v264
        %v359 = vunpack.c.l.b16 %v265
        %v360 = vunpack.c.l.b16 %v266
        %v361 = vunpack.c.l.b16 %v267
        %v362 = vunpack.c.l.b16 %v268
        %v363 = vunpack.c.l.b16 %v269
        %v364 = vpack.c.b16 %v329, %v328
        %v365 = vpack.c.b16 %v331, %v330
        %v366 = vpack.c.b16 %v333, %v332
        %v367 = vpack.c.b16 %v335, %v334
        %v368 = vpack.c.b16 %v337, %v336
        %v369 = vpack.c.b16 %v339, %v338
        %v370 = vpack.c.b16 %v341, %v340
        %v371 = vpack.c.b16 %v343, %v342
        %v372 = vpack.c.b16 %v345, %v344
        %v373 = vpack.c.b16 %v347, %v346
        %v374 = vpack.c.b16 %v349, %v348
        %v375 = vpack.c.b16 %v351, %v350
        %v376 = vpack.c.b16 %v353, %v352
        %v377 = vpack.c.b16 %v355, %v354
        %v378 = vpack.c.b16 %v357, %v356
        %v379 = vpack.c.b16 %v359, %v358
        %v380 = vpack.c.b16 %v361, %v360
        %v381 = vpack.c.b16 %v363, %v362
        %vm400 = vcmask 261120
        %v402 = vsel %vm400, %v289, 0
        %404 = vmatprep.subr.bf16.mxu0 0
        %405 = vmatpush1.bf16.msra.mxu0 %v364
        %406 = vmatprep.subr.bf16.mxu0 0
        %407 = vmatpush1.bf16.msra.mxu0 %v365
        %408 = vmatprep.subr.bf16.mxu0 0
        %409 = vmatpush1.bf16.msra.mxu0 %v366
        %410 = vmatprep.subr.bf16.mxu0 0
        %411 = vmatpush1.bf16.msra.mxu0 %v367
        %412 = vmatprep.subr.bf16.mxu0 0
        %413 = vmatpush1.bf16.msra.mxu0 %v368
        %414 = vmatprep.subr.bf16.mxu0 0
        %415 = vmatpush1.bf16.msra.mxu0 %v369
        %416 = vmatprep.subr.bf16.mxu0 0
        %417 = vmatpush1.bf16.msra.mxu0 %v370
        %418 = vmatprep.subr.bf16.mxu0 0
        %419 = vmatpush1.bf16.msra.mxu0 %v371
        %420 = vmatprep.subr.bf16.mxu0 0
        %421 = vmatpush1.bf16.msra.mxu0 %v372
        %422 = vmatprep.subr.bf16.mxu0 0
        %423 = vmatpush1.bf16.msra.mxu0 %v373
        %424 = vmatprep.subr.bf16.mxu0 0
        %425 = vmatpush1.bf16.msra.mxu0 %v374
        %426 = vmatprep.subr.bf16.mxu0 0
        %427 = vmatpush1.bf16.msra.mxu0 %v375
        %428 = vmatprep.subr.bf16.mxu0 0
        %429 = vmatpush1.bf16.msra.mxu0 %v376
        %430 = vmatprep.subr.bf16.mxu0 0
        %431 = vmatpush1.bf16.msra.mxu0 %v377
        %432 = vmatprep.subr.bf16.mxu0 0
        %433 = vmatpush1.bf16.msra.mxu0 %v378
        %434 = vmatprep.subr.bf16.mxu0 0
        %435 = vmatpush1.bf16.msra.mxu0 %v379
        %436 = vmatprep.mubr.bf16.mxu0 %v288
        %437 = vmatmul.mubr.bf16.gmra.mrb[0].mxu0 %v287
        %v438 = vpop.f32.mrb[0].mxu0
        %v439 = vadd.f32 %v275, %v438
        %v440 = vpop.f32.mrb[0].mxu0
        %v441 = vpop.f32.mrb[0].mxu0
        %v442 = vadd.f32 %v275, %v441
        %v443 = vpop.f32.mrb[0].mxu0
        %444 = vdwg.mxu0
        %445 = vmatprep.subr.bf16.mxu0 0
        %446 = vmatpush1.bf16.msra.mxu0 %v380
        %447 = vmatprep.subr.bf16.mxu0 0
        %448 = vmatpush1.bf16.msra.mxu0 %v381
        %449 = vmatprep.subr.bf16.mxu0 0
        %450 = vmatpush1.bf16.msra.mxu0 0
        %451 = vmatprep.subr.bf16.mxu0 0
        %452 = vmatpush1.bf16.msra.mxu0 0
        %453 = vmatprep.subr.bf16.mxu0 0
        %454 = vmatpush1.bf16.msra.mxu0 0
        %455 = vmatprep.subr.bf16.mxu0 0
        %456 = vmatpush1.bf16.msra.mxu0 0
        %457 = vmatprep.subr.bf16.mxu0 0
        %458 = vmatpush1.bf16.msra.mxu0 0
        %459 = vmatprep.subr.bf16.mxu0 0
        %460 = vmatpush1.bf16.msra.mxu0 0
        %461 = vmatprep.subr.bf16.mxu0 0
        %462 = vmatpush1.bf16.msra.mxu0 0
        %463 = vmatprep.subr.bf16.mxu0 0
        %464 = vmatpush1.bf16.msra.mxu0 0
        %465 = vmatprep.subr.bf16.mxu0 0
        %466 = vmatpush1.bf16.msra.mxu0 0
        %467 = vmatprep.subr.bf16.mxu0 0
        %468 = vmatpush1.bf16.msra.mxu0 0
        %469 = vmatprep.subr.bf16.mxu0 0
        %470 = vmatpush1.bf16.msra.mxu0 0
        %471 = vmatprep.subr.bf16.mxu0 0
        %472 = vmatpush1.bf16.msra.mxu0 0
        %473 = vmatprep.subr.bf16.mxu0 0
        %474 = vmatpush1.bf16.msra.mxu0 0
        %475 = vmatprep.subr.bf16.mxu0 0
        %476 = vmatpush1.bf16.msra.mxu0 0
        %477 = vmatprep.mubr.bf16.mxu0 0
        %478 = vmatmul.mubr.bf16.gmra.mrb[0].mxu0 %v402
        %v479 = vpop.f32.mrb[0].mxu0
        %v480 = vadd.f32 %v439, %v479
        %v481 = vpop.f32.mrb[0].mxu0
        %v482 = vpop.f32.mrb[0].mxu0
        %v483 = vadd.f32 %v442, %v482
        %v484 = vpop.f32.mrb[0].mxu0
        %485 = vdwg.mxu0
        %v486 = vmax.f32 %v480, 0.0
        %v487 = vmax.f32 %v483, 0.0
        %v488 = vpack.c.bf16 %v487, %v486
        %v489 = vld [vmem:[%s3] sm:$0xf]
        %v490 = vld [vmem:[%s3 + $0x4] sm:$0xf]
        %v491 = vld [vmem:[%s3 + $0x8] sm:$0xf]
        %v492 = vld [vmem:[%s3 + $0xc] sm:$0xf]
        %v493 = vld [vmem:[%s3 + $0x10] sm:$0xf]
        %v494 = vld [vmem:[%s3 + $0x14] sm:$0xf]
        %v495 = vld [vmem:[%s3 + $0x18] sm:$0xf]
        %v496 = vld [vmem:[%s3 + $0x1c] sm:$0xf]
        %v497 = vld [vmem:[%s4] sm:$0x1]
        %v499 = vlaneseq
        %v500 = vshrl.u32 %v499, 7
        %v501 = vsub.s32 0, %v500
        %v502 = vrot.slane %v497, %v501
        %v512 = vunpack.c.l.b16 %v489
        %v513 = vunpack.c.l.b16 %v490
        %v514 = vunpack.c.l.b16 %v491
        %v515 = vunpack.c.l.b16 %v492
        %v516 = vunpack.c.l.b16 %v493
        %v517 = vunpack.c.l.b16 %v494
        %v518 = vunpack.c.l.b16 %v495
        %v519 = vunpack.c.l.b16 %v496
        %v520 = vpack.c.b16 %v513, %v512
        %v521 = vpack.c.b16 %v515, %v514
        %v522 = vpack.c.b16 %v517, %v516
        %v523 = vpack.c.b16 %v519, %v518
        %vm528 = vcmask 523264
        %v530 = vsel %vm528, %v488, 0
        %532 = vmatprep.subr.bf16.mxu0 0
        %533 = vmatpush1.bf16.msra.mxu0 %v520
        %534 = vmatprep.subr.bf16.mxu0 0
        %535 = vmatpush1.bf16.msra.mxu0 %v521
        %536 = vmatprep.subr.bf16.mxu0 0
        %537 = vmatpush1.bf16.msra.mxu0 %v522
        %538 = vmatprep.subr.bf16.mxu0 0
        %539 = vmatpush1.bf16.msra.mxu0 %v523
        %540 = vmatprep.subr.bf16.mxu0 0
        %541 = vmatpush1.bf16.msra.mxu0 0
        %542 = vmatprep.subr.bf16.mxu0 0
        %543 = vmatpush1.bf16.msra.mxu0 0
        %544 = vmatprep.subr.bf16.mxu0 0
        %545 = vmatpush1.bf16.msra.mxu0 0
        %546 = vmatprep.subr.bf16.mxu0 0
        %547 = vmatpush1.bf16.msra.mxu0 0
        %548 = vmatprep.subr.bf16.mxu0 0
        %549 = vmatpush1.bf16.msra.mxu0 0
        %550 = vmatprep.subr.bf16.mxu0 0
        %551 = vmatpush1.bf16.msra.mxu0 0
        %552 = vmatprep.subr.bf16.mxu0 0
        %553 = vmatpush1.bf16.msra.mxu0 0
        %554 = vmatprep.subr.bf16.mxu0 0
        %555 = vmatpush1.bf16.msra.mxu0 0
        %556 = vmatprep.subr.bf16.mxu0 0
        %557 = vmatpush1.bf16.msra.mxu0 0
        %558 = vmatprep.subr.bf16.mxu0 0
        %559 = vmatpush1.bf16.msra.mxu0 0
        %560 = vmatprep.subr.bf16.mxu0 0
        %561 = vmatpush1.bf16.msra.mxu0 0
        %562 = vmatprep.subr.bf16.mxu0 0
        %563 = vmatpush1.bf16.msra.mxu0 0
        %564 = vmatprep.mubr.bf16.mxu0 0
        %565 = vmatmul.mubr.bf16.gmra.mrb[0].mxu0 %v530
        %v566 = vpop.f32.mrb[0].mxu0
        %v567 = vadd.f32 %v502, %v566
        %v568 = vpop.f32.mrb[0].mxu0
        %v569 = vpop.f32.mrb[0].mxu0
        %v570 = vadd.f32 %v502, %v569
        %v571 = vpop.f32.mrb[0].mxu0
        %572 = vdwg.mxu0
        %vm573 = vcmask 130048
        %574 = vst.msk [vmem:[%s220] sm:$0xff] %vm573, %v567
        %575 = vst.msk [vmem:[%s220 + $0x8] sm:$0xff] %vm573, %v570
        %s576 = sand.u32 %s137, 1
        %s577 = scalar_lea.sflag [#allocation3], %s576
        %s578 = sand.u32 %s137, 1
        %s579 = smul.addr %s578, 16
        %s580 = scalar_lea.vmem [#allocation2], %s579
        // Predicated region
        $region41: #{_forward_impl.3} parent=39 // pred_check
          %p581 = pneg %p147
        $region42: #{_forward_impl.3} parent=39 // pred_check_branch
          %583 = sbr.rel (%p581) target = $region44
        $region43: #{_forward_impl.3} parent=39 // pred_region
          %s584 = smul.u32 2, %s19
          %s586 = ssub.s32 256, 256
          %587 = vsyncadd %s577, %s586
          %s588 = smul.addr %s584, 128
          %s589 = scalar_lea.hbm %s5, %s588
          %s590 = sshll.u32 %s580, 4
          %s591 = int_to_ptr.vmem [resolvable:$true] %s590
          %596 = dma.vmem_to_hbm [thread:$0]  %s591, 256, %s589, %s577, 128, 128, 8
        $region44: #{_forward_impl.3} parent=39 // pred_fallthru
          _
      $region40: #{_forward_impl.3} parent=5 // pred_fallthru
        _
      %p597 = scmp.le.s32.totalorder 2, %s14
      // Predicated region
      $region45: #{_forward_impl.3} parent=5 // pred_check
        %p598 = pneg %p597
      $region46: #{_forward_impl.3} parent=5 // pred_check_branch
        %600 = sbr.rel (%p598) target = $region48
      $region47: #{_forward_impl.3} parent=5 // pred_region
        %s601 = ssub.s32 %s14, 2
        // Predicated region
        $region49: #{_forward_impl.3} parent=47 // pred_check
          %p602 = pneg %p153
        $region50: #{_forward_impl.3} parent=47 // pred_check_branch
          %604 = sbr.rel (%p602) target = $region52
        $region51: #{_forward_impl.3} parent=47 // pred_region
          %s605 = sand.u32 %s138, 1
          %s606 = scalar_lea.sflag [#allocation3], %s605
          %s607 = sand.u32 %s138, 1
          %s608 = smul.addr %s607, 16
          %s609 = scalar_lea.vmem [#allocation2], %s608
          %610 = dma.done %s606, 256
        $region52: #{_forward_impl.3} parent=47 // pred_fallthru
          _
      $region48: #{_forward_impl.3} parent=5 // pred_fallthru
        _
    $region6: #{_forward_impl.3} parent=1 // loop_footer
      %s18 = sadd.s32 1, %s14
    $region7: #{_forward_impl.3} parent=1 // loop_footer_branch
      %13 = sbr.rel target = $region3
    $region8: #{_forward_impl.3} parent=1 // loop_exit
      _
    %611 = vsyncpa [#allocation3], 1
    %s612 = scalar_lea.sflag [#allocation3], 1
    %613 = vsyncpa %s612, 1

</llo_original>
